<compile_context>
chip_gen: v5e
topology: v5e:2x2
jax: 0.10.0
libtpu: 0.0.40
codegen_flags: <defaults>
</compile_context>

<pallas_src>
import functools

import jax
import jax.numpy as jnp
from jax.experimental import pallas as pl
from jax.experimental.pallas import tpu as pltpu

_LANE = 128
_SUBLANE = 8


def _round_up(x, m):
    return ((x + m - 1) // m) * m


def _bernoulli_head_kernel(x_ref, w_ref, b_ref,
                           logits_ref, probs_ref, mode_ref, ent_ref,
                           *, num_outputs):
    # x: (tB, K) f32   w: (K, Np) f32 (pre-transposed, lane-padded)   b: (1, Np)
    x = x_ref[...]
    w = w_ref[...]
    logits = jnp.dot(x, w, preferred_element_type=jnp.float32) + b_ref[...]
    probs = jax.nn.sigmoid(logits)

    logits_ref[...] = logits
    probs_ref[...] = probs
    mode_ref[...] = (probs > 0.5).astype(jnp.float32)

    # Per-row Bernoulli entropy, masking out the padded lanes (which would
    # otherwise each contribute log(2)).
    lane = jax.lax.broadcasted_iota(jnp.int32, logits.shape, dimension=1)
    valid = lane < num_outputs
    ent_elem = jnp.where(valid,
                         jax.nn.softplus(-logits) + (1.0 - probs) * logits,
                         0.0)
    ent_ref[...] = jnp.sum(ent_elem, axis=-1, keepdims=True)


def bernoulli_head(x, w_pad, b_pad, num_outputs):
    """Run the fused Pallas head. Returns (logits, probs, mode, entropy)."""
    x = x.astype(jnp.float32)
    B, K = x.shape
    Kw, Np = w_pad.shape
    assert Kw == K and Np % _LANE == 0

    # Batch tiling: >=512 rows per step for large B (amortizes pipeline
    # overhead), multiple of 8 sublanes, padded batch if needed.
    tB = min(512, _round_up(B, _SUBLANE))
    B_pad = _round_up(B, tB)
    if B_pad != B:
        x = jnp.pad(x, ((0, B_pad - B), (0, 0)))

    grid = (B_pad // tB,)
    kernel = functools.partial(_bernoulli_head_kernel, num_outputs=num_outputs)

    flops = 2 * B_pad * K * Np + 6 * B_pad * Np
    transcendentals = 2 * B_pad * Np  # sigmoid + softplus
    bytes_accessed = 4 * (B_pad * K + K * Np + Np + 3 * B_pad * Np + B_pad)

    out_shape = (
        jax.ShapeDtypeStruct((B_pad, Np), jnp.float32),  # logits
        jax.ShapeDtypeStruct((B_pad, Np), jnp.float32),  # probs
        jax.ShapeDtypeStruct((B_pad, Np), jnp.float32),  # mode
        jax.ShapeDtypeStruct((B_pad, 1), jnp.float32),   # entropy (per row)
    )

    logits_p, probs_p, mode_p, ent_p = pl.pallas_call(
        kernel,
        out_shape=out_shape,
        grid=grid,
        in_specs=[
            pl.BlockSpec((tB, K), lambda i: (i, 0)),   # x tile, pipelined
            pl.BlockSpec((K, Np), lambda i: (0, 0)),   # weight, resident
            pl.BlockSpec((1, Np), lambda i: (0, 0)),   # bias, resident
        ],
        out_specs=(
            pl.BlockSpec((tB, Np), lambda i: (i, 0)),
            pl.BlockSpec((tB, Np), lambda i: (i, 0)),
            pl.BlockSpec((tB, Np), lambda i: (i, 0)),
            pl.BlockSpec((tB, 1), lambda i: (i, 0)),
        ),
        compiler_params=pltpu.CompilerParams(
            dimension_semantics=("parallel",)),
        cost_estimate=pl.CostEstimate(
            flops=flops,
            transcendentals=transcendentals,
            bytes_accessed=bytes_accessed),
    )(x, w_pad, b_pad)

    logits = logits_p[:B, :num_outputs]
    probs = probs_p[:B, :num_outputs]
    mode = mode_p[:B, :num_outputs]
    entropy = ent_p[:B, 0]
    return logits, probs, mode, entropy


class FixedBernoulli:
    """JAX mirror of FixedBernoulli(torch.distributions.Bernoulli)."""

    def __init__(self, logits, probs, mode_val, entropy_val):
        self.logits = logits
        self.probs = probs
        self._mode = mode_val
        self._entropy = entropy_val

    def log_probs(self, actions):
        # Numerically-stable per-element log-prob from logits, summed over
        # all non-batch dims, trailing singleton kept (matches torch code).
        lp = -jax.nn.softplus(jnp.where(actions > 0.5, -self.logits, self.logits))
        lp = lp.reshape(actions.shape[0], -1).sum(-1)
        return lp[:, None]

    def entropy(self):
        return self._entropy          # fused in-kernel, already summed over -1

    def mode(self):
        return self._mode             # fused in-kernel: (probs > 0.5).float()


class Bernoulli:
    """Pallas-backed equivalent of the PyTorch Bernoulli head module."""

    def __init__(self, num_inputs, num_outputs, key):
        # Deterministic init mirroring the torch module:
        #   weight: orthogonal_  |  bias: constant_(0)
        ortho = jax.nn.initializers.orthogonal()
        self.weight = ortho(key, (num_outputs, num_inputs), jnp.float32)  # torch layout
        self.bias = jnp.zeros((num_outputs,), jnp.float32)
        self.num_outputs = num_outputs

        # One-time layout prep for the kernel: transpose + lane-pad to 128.
        n_pad = _round_up(num_outputs, _LANE)
        w_t = self.weight.T                                   # (K, N)
        self._w_pad = jnp.pad(w_t, ((0, 0), (0, n_pad - num_outputs)))
        self._b_pad = jnp.pad(self.bias, (0, n_pad - num_outputs)).reshape(1, n_pad)

    def __call__(self, x):
        logits, probs, mode, ent = bernoulli_head(
            x, self._w_pad, self._b_pad, self.num_outputs)
        return FixedBernoulli(logits, probs, mode, ent)


if __name__ == "__main__":
    key = jax.random.PRNGKey(0)
    k_w, k_x = jax.random.split(key)

    B, num_inputs, num_outputs = 8, 32, 8
    module = Bernoulli(num_inputs, num_outputs, k_w)
    x = jax.random.normal(k_x, (B, num_inputs), jnp.float32)

    dist = module(x)
    jax.block_until_ready(dist.logits)
    jax.block_until_ready(dist.probs)

    # Reference in plain JAX.
    ref_logits = x @ module.weight.T + module.bias
    ref_probs = jax.nn.sigmoid(ref_logits)
    ref_mode = (ref_probs > 0.5).astype(jnp.float32)
    ref_ent = (jax.nn.softplus(-ref_logits) + (1.0 - ref_probs) * ref_logits).sum(-1)

    assert jnp.allclose(dist.logits, ref_logits, atol=1e-5), "logits mismatch"
    assert jnp.allclose(dist.probs, ref_probs, atol=1e-5), "probs mismatch"
    assert jnp.allclose(dist.mode(), ref_mode), "mode mismatch"
    assert jnp.allclose(dist.entropy(), ref_ent, atol=1e-4), "entropy mismatch"

    # Exercise log_probs (thin jnp glue on kernel logits).
    actions = dist.mode()
    ref_lp = (-jax.nn.softplus(
        jnp.where(actions > 0.5, -ref_logits, ref_logits))).sum(-1)[:, None]
    lp = jax.block_until_ready(dist.log_probs(actions))
    assert jnp.allclose(lp, ref_lp, atol=1e-5), "log_probs mismatch"

    # TODO(synk): random sampling (torch.distributions.Bernoulli.sample) is not
    # part of the spec'd helpers and is not implemented.
    print("KERNEL_OK")
</pallas_src>

<mosaic_0001>
module attributes {stable_mosaic.version = 11 : i64} {
  func.func @_bernoulli_head_kernel(%arg0: i32, %arg1: memref<8x32xf32, #tpu.memory_space<vmem>>, %arg2: memref<32x128xf32, #tpu.memory_space<vmem>>, %arg3: memref<1x128xf32, #tpu.memory_space<vmem>>, %arg4: memref<8x128xf32, #tpu.memory_space<vmem>>, %arg5: memref<8x128xf32, #tpu.memory_space<vmem>>, %arg6: memref<8x128xf32, #tpu.memory_space<vmem>>, %arg7: memref<8x1xf32, #tpu.memory_space<vmem>>) attributes {dimension_semantics = [#tpu.dimension_semantics<parallel>], iteration_bounds = array<i64: 1>, scalar_prefetch = 0 : i64, scratch_operands = 0 : i64, tpu.core_type = #tpu.core_type<tc>, window_params = [{transform_indices = @transform_0, window_bounds = array<i64: 8, 32>}, {pipeline_mode = #tpu.pipeline_mode<synchronous>, transform_indices = @transform_1, window_bounds = array<i64: 32, 128>}, {pipeline_mode = #tpu.pipeline_mode<synchronous>, transform_indices = @transform_2, window_bounds = array<i64: 1, 128>}, {transform_indices = @transform_3, window_bounds = array<i64: 8, 128>}, {transform_indices = @transform_4, window_bounds = array<i64: 8, 128>}, {transform_indices = @transform_5, window_bounds = array<i64: 8, 128>}, {transform_indices = @transform_6, window_bounds = array<i64: 8, 1>}]} {
    %c0 = arith.constant 0 : index
    %c0_0 = arith.constant 0 : index
    %0 = vector.load %arg1[%c0, %c0_0] : memref<8x32xf32, #tpu.memory_space<vmem>>, vector<8x32xf32>
    %c0_1 = arith.constant 0 : index
    %c0_2 = arith.constant 0 : index
    %1 = vector.load %arg2[%c0_1, %c0_2] : memref<32x128xf32, #tpu.memory_space<vmem>>, vector<32x128xf32>
    %cst = arith.constant dense<0.000000e+00> : vector<8x128xf32>
    %2 = tpu.matmul %0, %1, %cst {dimension_numbers = #tpu.dot_dimension_numbers<[1], [0], [0], [1], [0, 0, 1, 1], [], []>} : vector<8x32xf32>, vector<32x128xf32>, vector<8x128xf32> -> vector<8x128xf32>
    %c0_3 = arith.constant 0 : index
    %c0_4 = arith.constant 0 : index
    %3 = vector.load %arg3[%c0_3, %c0_4] : memref<1x128xf32, #tpu.memory_space<vmem>>, vector<1x128xf32>
    %4 = vector.broadcast %3 : vector<1x128xf32> to vector<8x128xf32>
    %5 = arith.addf %2, %4 : vector<8x128xf32>
    %6 = arith.negf %5 : vector<8x128xf32>
    %7 = math.exp %6 : vector<8x128xf32>
    %cst_5 = arith.constant 1.000000e+00 : f32
    %8 = vector.broadcast %cst_5 : f32 to vector<8x128xf32>
    %9 = arith.addf %8, %7 : vector<8x128xf32>
    %10 = arith.divf %8, %9 : vector<8x128xf32>
    %c0_6 = arith.constant 0 : index
    %c0_7 = arith.constant 0 : index
    %11 = vector.load %arg4[%c0_6, %c0_7] : memref<8x128xf32, #tpu.memory_space<vmem>>, vector<8x128xf32>
    tpu.vector_store %arg4[%c0_6, %c0_7], %5 {strides = array<i32>} : memref<8x128xf32, #tpu.memory_space<vmem>>, vector<8x128xf32>,
    %c0_8 = arith.constant 0 : index
    %c0_9 = arith.constant 0 : index
    %12 = vector.load %arg5[%c0_8, %c0_9] : memref<8x128xf32, #tpu.memory_space<vmem>>, vector<8x128xf32>
    tpu.vector_store %arg5[%c0_8, %c0_9], %10 {strides = array<i32>} : memref<8x128xf32, #tpu.memory_space<vmem>>, vector<8x128xf32>,
    %cst_10 = arith.constant 5.000000e-01 : f32
    %13 = vector.broadcast %cst_10 : f32 to vector<8x128xf32>
    %14 = arith.cmpf ogt, %10, %13 : vector<8x128xf32>
    %15 = arith.extui %14 : vector<8x128xi1> to vector<8x128xi32>
    %16 = arith.sitofp %15 : vector<8x128xi32> to vector<8x128xf32>
    %c0_11 = arith.constant 0 : index
    %c0_12 = arith.constant 0 : index
    %17 = vector.load %arg6[%c0_11, %c0_12] : memref<8x128xf32, #tpu.memory_space<vmem>>, vector<8x128xf32>
    tpu.vector_store %arg6[%c0_11, %c0_12], %16 {strides = array<i32>} : memref<8x128xf32, #tpu.memory_space<vmem>>, vector<8x128xf32>,
    %18 = tpu.iota {dimensions = array<i32: 1>} : vector<8x128xi32>
    %c8_i32 = arith.constant 8 : i32
    %19 = vector.broadcast %c8_i32 : i32 to vector<8x128xi32>
    %20 = arith.cmpi slt, %18, %19 : vector<8x128xi32>
    %cst_13 = arith.constant 0.000000e+00 : f32
    %21 = vector.broadcast %cst_13 : f32 to vector<8x128xf32>
    %22 = arith.subf %21, %5 : vector<8x128xf32>
    %cst_14 = arith.constant 0.000000e+00 : f32
    %23 = vector.broadcast %cst_14 : f32 to vector<8x128xf32>
    %24 = arith.maximumf %22, %23 : vector<8x128xf32>
    %25 = vector.broadcast %cst_14 : f32 to vector<8x128xf32>
    %26 = arith.subf %22, %25 : vector<8x128xf32>
    %27 = arith.cmpf one, %26, %26 : vector<8x128xf32>
    %28 = vector.broadcast %cst_14 : f32 to vector<8x128xf32>
    %29 = arith.addf %22, %28 : vector<8x128xf32>
    %30 = math.absf %26 : vector<8x128xf32>
    %cst_15 = arith.constant 0.000000e+00 : f32
    %31 = vector.broadcast %cst_15 : f32 to vector<8x128xf32>
    %32 = arith.subf %31, %30 : vector<8x128xf32>
    %33 = math.exp %32 : vector<8x128xf32>
    %34 = math.log1p %33 : vector<8x128xf32>
    %35 = arith.addf %24, %34 : vector<8x128xf32>
    %36 = arith.select %27, %29, %35 : vector<8x128xi1>, vector<8x128xf32>
    %cst_16 = arith.constant 1.000000e+00 : f32
    %37 = vector.broadcast %cst_16 : f32 to vector<8x128xf32>
    %38 = arith.subf %37, %10 : vector<8x128xf32>
    %39 = arith.mulf %38, %5 : vector<8x128xf32>
    %40 = arith.addf %36, %39 : vector<8x128xf32>
    %cst_17 = arith.constant 0.000000e+00 : f32
    %41 = vector.broadcast %cst_17 : f32 to vector<8x128xf32>
    %42 = arith.select %20, %40, %41 : vector<8x128xi1>, vector<8x128xf32>
    %cst_18 = arith.constant dense<0.000000e+00> : vector<8xf32>
    %43 = vector.multi_reduction <add>, %42, %cst_18 [1] : vector<8x128xf32> to vector<8xf32>
    %44 = vector.shape_cast %43 : vector<8xf32> to vector<8x1xf32>
    %c0_19 = arith.constant 0 : index
    %c0_20 = arith.constant 0 : index
    %45 = vector.load %arg7[%c0_19, %c0_20] : memref<8x1xf32, #tpu.memory_space<vmem>>, vector<8x1xf32>
    tpu.vector_store %arg7[%c0_19, %c0_20], %44 {strides = array<i32>} : memref<8x1xf32, #tpu.memory_space<vmem>>, vector<8x1xf32>,
    return
  }
  func.func @transform_0(%arg0: i32) -> (i32, i32) {
    %c0_i32 = arith.constant 0 : i32
    %c0_i32_0 = arith.constant 0 : i32
    return %arg0, %c0_i32 : i32, i32
  }
  func.func @transform_1(%arg0: i32) -> (i32, i32) {
    %c0_i32 = arith.constant 0 : i32
    %c0_i32_0 = arith.constant 0 : i32
    %c0_i32_1 = arith.constant 0 : i32
    return %c0_i32, %c0_i32_0 : i32, i32
  }
  func.func @transform_2(%arg0: i32) -> (i32, i32) {
    %c0_i32 = arith.constant 0 : i32
    %c0_i32_0 = arith.constant 0 : i32
    %c0_i32_1 = arith.constant 0 : i32
    return %c0_i32, %c0_i32_0 : i32, i32
  }
  func.func @transform_3(%arg0: i32) -> (i32, i32) {
    %c0_i32 = arith.constant 0 : i32
    %c0_i32_0 = arith.constant 0 : i32
    return %arg0, %c0_i32 : i32, i32
  }
  func.func @transform_4(%arg0: i32) -> (i32, i32) {
    %c0_i32 = arith.constant 0 : i32
    %c0_i32_0 = arith.constant 0 : i32
    return %arg0, %c0_i32 : i32, i32
  }
  func.func @transform_5(%arg0: i32) -> (i32, i32) {
    %c0_i32 = arith.constant 0 : i32
    %c0_i32_0 = arith.constant 0 : i32
    return %arg0, %c0_i32 : i32, i32
  }
  func.func @transform_6(%arg0: i32) -> (i32, i32) {
    %c0_i32 = arith.constant 0 : i32
    %c0_i32_0 = arith.constant 0 : i32
    return %arg0, %c0_i32 : i32, i32
  }
}

</mosaic_0001>

<llo_original>
// kernel: tpu_custom_call.1
$region0: #{tpu_custom_call.1}
  #allocation0 [shape = 'u32[]', space=smem, size = 0x4, offset = 0x4, fixed_abs, tag = 'smem constant byte address 0x4 - core index']
  #allocation1 [shape = 'u32[72,128]{1,0:T(1,128)}', space=vmem, size = 0x9000, scoped, tag = 'internal scratch']
  %s0 = inlined_call_operand.hbm [shape: f32[8,32], index: 0, kind: input, shape index: {}]
  %s1 = inlined_call_operand.hbm [shape: f32[32,128], index: 1, kind: input, shape index: {}]
  %s2 = inlined_call_operand.vmem [shape: f32[1,128], index: 2, kind: input, shape index: {}]
  %s3 = inlined_call_operand.hbm [shape: f32[8,128], index: 3, kind: output, shape index: {0}]
  %s4 = inlined_call_operand.hbm [shape: f32[8,128], index: 4, kind: output, shape index: {1}]
  %s5 = inlined_call_operand.hbm [shape: f32[8,128], index: 5, kind: output, shape index: {2}]
  %s6 = inlined_call_operand.vmem [shape: f32[8,1], index: 6, kind: output, shape index: {3}]
  %7 = xla_tuple %s3, %s4, %s5, %s6
  %s8 = sld [smem:[#allocation0]]
  $region54: #{tpu_custom_call.1} parent=0
    _
  %s10 = ssub.s32 1, %s8
  %s11 = scalar_select 0, %s10, %s8
  $region1: #{tpu_custom_call.1} parent=0
    #allocation2 [shape = 'u8[4096]{0}', space=vmem, size = 0x1000, scoped, tag = 'input window, operand 0, single buffered']
    #allocation3 [shape = 's32[1]{0}', space=sflag, size = 0x4, scoped, tag = 'scoped memory for tpu_custom_call.1']
    #allocation4 [shape = 's32[1]{0}', space=sflag, size = 0x4, scoped, tag = 'scoped memory for tpu_custom_call.1']
    #allocation5 [shape = 'u8[16384]{0}', space=vmem, size = 0x4000, scoped, tag = 'input window, operand 1, single buffered']
    #allocation6 [shape = 's32[1]{0}', space=sflag, size = 0x4, scoped, tag = 'scoped memory for tpu_custom_call.1']
    #allocation7 [shape = 'u8[4096]{0}', space=vmem, size = 0x1000, scoped, tag = 'output window, operand 0, single buffered']
    #allocation8 [shape = 'u8[4096]{0}', space=vmem, size = 0x1000, scoped, tag = 'output window, operand 1, single buffered']
    #allocation9 [shape = 's32[1]{0}', space=sflag, size = 0x4, scoped, tag = 'scoped memory for tpu_custom_call.1']
    #allocation10 [shape = 'u8[4096]{0}', space=vmem, size = 0x1000, scoped, tag = 'output window, operand 2, single buffered']
    %12 = vsyncpa [#allocation3], 0
    %13 = vsyncpa [#allocation6], 0
    %14 = vsyncpa [#allocation4], 0
    %15 = vsyncpa [#allocation9], 0
    // Predicated region
    $region2: #{tpu_custom_call.1} parent=1 // pred_check
      _
    $region3: #{tpu_custom_call.1} parent=1 // pred_check_branch
      %17 = sbr.rel (0) target = $region5
    $region4: #{tpu_custom_call.1} parent=1 // pred_region
      %19 = vsyncadd [#allocation3], 0
      %s21 = sshll.u32 %s0, 4
      %s22 = int_to_ptr.hbm [resolvable:$true] %s21
      %s23 = sshll.u32 [#allocation2], 4
      %s24 = int_to_ptr.vmem [resolvable:$true] %s23
      %26 = dma.hbm_to_vmem [thread:$0]  %s22, 128, %s24, [#allocation3]
    $region5: #{tpu_custom_call.1} parent=1 // pred_fallthru
      _
    // Predicated region
    $region6: #{tpu_custom_call.1} parent=1 // pred_check
      _
    $region7: #{tpu_custom_call.1} parent=1 // pred_check_branch
      %28 = sbr.rel (0) target = $region9
    $region8: #{tpu_custom_call.1} parent=1 // pred_region
      %30 = vsyncadd [#allocation6], 0
      %s31 = sshll.u32 %s1, 4
      %s32 = int_to_ptr.hbm [resolvable:$true] %s31
      %s33 = sshll.u32 [#allocation5], 4
      %s34 = int_to_ptr.vmem [resolvable:$true] %s33
      %39 = dma.hbm_to_vmem [thread:$0]  %s32, 512, %s34, [#allocation6], 128, 128, 8
    $region9: #{tpu_custom_call.1} parent=1 // pred_fallthru
      _
    // Predicated region
    $region10: #{tpu_custom_call.1} parent=1 // pred_check
      _
    $region11: #{tpu_custom_call.1} parent=1 // pred_check_branch
      %41 = sbr.rel (0) target = $region13
    $region12: #{tpu_custom_call.1} parent=1 // pred_region
      _
    $region13: #{tpu_custom_call.1} parent=1 // pred_fallthru
      _
    // Predicated region
    $region14: #{tpu_custom_call.1} parent=1 // pred_check
      _
    $region15: #{tpu_custom_call.1} parent=1 // pred_check_branch
      %43 = sbr.rel (0) target = $region17
    $region16: #{tpu_custom_call.1} parent=1 // pred_region
      %45 = dma.done [#allocation3], 128
    $region17: #{tpu_custom_call.1} parent=1 // pred_fallthru
      _
    // Predicated region
    $region18: #{tpu_custom_call.1} parent=1 // pred_check
      _
    $region19: #{tpu_custom_call.1} parent=1 // pred_check_branch
      %47 = sbr.rel (0) target = $region21
    $region20: #{tpu_custom_call.1} parent=1 // pred_region
      %49 = dma.done [#allocation6], 512
    $region21: #{tpu_custom_call.1} parent=1 // pred_fallthru
      _
    %v50 = vld [vmem:[#allocation2] sm:$0xff]
    %v51 = vld [vmem:[#allocation5] sm:$0xff]
    %v52 = vld [vmem:[#allocation5 + $0x8] sm:$0xff]
    %v53 = vld [vmem:[#allocation5 + $0x10] sm:$0xff]
    %v54 = vld [vmem:[#allocation5 + $0x18] sm:$0xff]
    %v55 = vld [vmem:[%s2] sm:$0x1]
    %v57 = vperm.slane %v55, 0
    %vm59 = vcmask 261120
    %v61 = vsel %vm59, %v50, 0
    %63 = vmatpush.msra.mxu0 0.0
    %64 = vmatpush.msra.mxu0 0.0
    %65 = vmatpush.msra.mxu0 0.0
    %66 = vmatpush.msra.mxu0 0.0
    %67 = vmatpush.msra.mxu0 0.0
    %68 = vmatpush.msra.mxu0 0.0
    %69 = vmatpush.msra.mxu0 0.0
    %70 = vmatpush.msra.mxu0 0.0
    %71 = vmatpush.msra.mxu0 0.0
    %72 = vmatpush.msra.mxu0 0.0
    %73 = vmatpush.msra.mxu0 0.0
    %74 = vmatpush.msra.mxu0 0.0
    %75 = vmatpush.msra.mxu0 %v54
    %76 = vmatpush.msra.mxu0 %v53
    %77 = vmatpush.msra.mxu0 %v52
    %78 = vmatpush.msra.mxu0 %v51
    %79 = vmatmul.f32.gmra.mxu0 %v61
    %v80 = vpop.f32.mrf.mxu0
    %v81 = vadd.f32 %v57, %v80
    %82 = vdwg.mxu0
    %v83 = vxor.u32 %v81, 2147483648
    %v84 = vmul.f32 %v83, 1.442695
    %v85 = vpow.pop %v84
    %v86 = vadd.f32 %v85, 1.0
    %v87 = vrcp.pop %v86
    %v88 = vmul.f32 %v86, %v87
    %v89 = vsub.f32 1.0, %v88
    %v90 = vmul.f32 %v87, %v89
    %v91 = vadd.f32 %v87, %v90
    %vm92 = vweird.f32 %v86
    %vm93 = vweird.f32 %v87
    %vm94 = vmor %vm92, %vm93
    %v95 = vsel %vm94, %v87, %v91
    %v96 = vand.u32 2147483647, %v86
    %vm97 = vcmp.eq.f32.partialorder %v96, 8.507059e+37
    %v98 = vand.u32 %v86, 2147483648
    %v99 = vor.u32 1.1754944e-38, %v98
    %v100 = vsel %vm97, %v99, %v95
    %v101 = vmul.f32 1.0, %v100
    %102 = vst [vmem:[#allocation7] sm:$0xff] %v81
    %103 = vst [vmem:[#allocation8] sm:$0xff] %v101
    %vm104 = vcmp.gt.f32.partialorder %v101, 0.5
    %v105 = vsel %vm104, 1, 0
    %v106 = vcvt.s32.f32 %v105
    %107 = vst [vmem:[#allocation10] sm:$0xff] %v106
    %v108 = vlaneseq
    %v109 = vand.u32 %v108, 127
    %vm110 = vcmp.lt.s32.totalorder %v109, 8
    %v111 = vsub.f32 0.0, %v81
    %v112 = vmax.f32 %v111, 0.0
    %vm113 = vcmp.ne.f32.partialorder %v111, %v111
    %v114 = vadd.f32 %v111, 0.0
    %v115 = vand.u32 2147483647, %v111
    %v116 = vsub.f32 0.0, %v115
    %v117 = vmul.f32 %v116, 1.442695
    %v118 = vpow.pop %v117
    %v119 = vadd.f32 %v118, 1.0
    %v120 = vlog2.pop %v119
    %v121 = vmul.f32 %v120, 0.6931472
    %v122 = vmul.f32 -0.5, %v118
    %v123 = vadd.f32 %v122, 1.0
    %v124 = vmul.f32 %v123, %v118
    %v125 = vand.u32 2147483647, %v118
    %vm126 = vcmp.lt.f32.partialorder %v125, 0.0004427343
    %v127 = vsel %vm126, %v124, %v121
    %v128 = vadd.f32 %v112, %v127
    %v129 = vsel %vm113, %v114, %v128
    %v130 = vsub.f32 1.0, %v101
    %v131 = vmul.f32 %v130, %v81
    %v132 = vadd.f32 %v129, %v131
    %v133 = vsel %vm110, %v132, 0.0
    %134 = vadd.xlane.f32.xlu0 %v133
    %v135 = vpop.xlane.xlu0 %134
    %vm136 = vcmask 7168
    %137 = vst.msk [vmem:[%s6] sm:$0xff] %vm136, %v135
    // Predicated region
    $region22: #{tpu_custom_call.1} parent=1 // pred_check
      _
    $region23: #{tpu_custom_call.1} parent=1 // pred_check_branch
      %139 = sbr.rel (0) target = $region25
    $region24: #{tpu_custom_call.1} parent=1 // pred_region
      %141 = vsyncadd [#allocation4], 0
      %s143 = sshll.u32 [#allocation7], 4
      %s144 = int_to_ptr.vmem [resolvable:$true] %s143
      %s145 = sshll.u32 %s3, 4
      %s146 = int_to_ptr.hbm [resolvable:$true] %s145
      %148 = dma.vmem_to_hbm [thread:$0]  %s144, 128, %s146, [#allocation4]
    $region25: #{tpu_custom_call.1} parent=1 // pred_fallthru
      _
    // Predicated region
    $region26: #{tpu_custom_call.1} parent=1 // pred_check
      _
    $region27: #{tpu_custom_call.1} parent=1 // pred_check_branch
      %150 = sbr.rel (0) target = $region29
    $region28: #{tpu_custom_call.1} parent=1 // pred_region
      %152 = vsyncadd [#allocation9], 0
      %s154 = sshll.u32 [#allocation8], 4
      %s155 = int_to_ptr.vmem [resolvable:$true] %s154
      %s156 = sshll.u32 %s4, 4
      %s157 = int_to_ptr.hbm [resolvable:$true] %s156
      %159 = dma.vmem_to_hbm [thread:$0]  %s155, 128, %s157, [#allocation9]
    $region29: #{tpu_custom_call.1} parent=1 // pred_fallthru
      _
    // Predicated region
    $region30: #{tpu_custom_call.1} parent=1 // pred_check
      _
    $region31: #{tpu_custom_call.1} parent=1 // pred_check_branch
      %161 = sbr.rel (0) target = $region33
    $region32: #{tpu_custom_call.1} parent=1 // pred_region
      %163 = vsyncadd [#allocation9], 0
      %s165 = sshll.u32 [#allocation10], 4
      %s166 = int_to_ptr.vmem [resolvable:$true] %s165
      %s167 = sshll.u32 %s5, 4
      %s168 = int_to_ptr.hbm [resolvable:$true] %s167
      %170 = dma.vmem_to_hbm [thread:$0]  %s166, 128, %s168, [#allocation9]
    $region33: #{tpu_custom_call.1} parent=1 // pred_fallthru
      _
    // Predicated region
    $region34: #{tpu_custom_call.1} parent=1 // pred_check
      _
    $region35: #{tpu_custom_call.1} parent=1 // pred_check_branch
      %172 = sbr.rel (0) target = $region37
    $region36: #{tpu_custom_call.1} parent=1 // pred_region
      _
    $region37: #{tpu_custom_call.1} parent=1 // pred_fallthru
      _
    // Predicated region
    $region38: #{tpu_custom_call.1} parent=1 // pred_check
      _
    $region39: #{tpu_custom_call.1} parent=1 // pred_check_branch
      %174 = sbr.rel (0) target = $region41
    $region40: #{tpu_custom_call.1} parent=1 // pred_region
      %176 = dma.done [#allocation4], 128
    $region41: #{tpu_custom_call.1} parent=1 // pred_fallthru
      _
    // Predicated region
    $region42: #{tpu_custom_call.1} parent=1 // pred_check
      _
    $region43: #{tpu_custom_call.1} parent=1 // pred_check_branch
      %178 = sbr.rel (0) target = $region45
    $region44: #{tpu_custom_call.1} parent=1 // pred_region
      %180 = dma.done [#allocation9], 128
    $region45: #{tpu_custom_call.1} parent=1 // pred_fallthru
      _
    // Predicated region
    $region46: #{tpu_custom_call.1} parent=1 // pred_check
      _
    $region47: #{tpu_custom_call.1} parent=1 // pred_check_branch
      %182 = sbr.rel (0) target = $region49
    $region48: #{tpu_custom_call.1} parent=1 // pred_region
      %184 = dma.done [#allocation9], 128
    $region49: #{tpu_custom_call.1} parent=1 // pred_fallthru
      _
    // Predicated region
    $region50: #{tpu_custom_call.1} parent=1 // pred_check
      _
    $region51: #{tpu_custom_call.1} parent=1 // pred_check_branch
      %186 = sbr.rel (0) target = $region53
    $region52: #{tpu_custom_call.1} parent=1 // pred_region
      _
    $region53: #{tpu_custom_call.1} parent=1 // pred_fallthru
      _
    %187 = vsyncpa [#allocation3], 1
    %188 = vsyncpa [#allocation6], 1
    %189 = vsyncpa [#allocation4], 1
    %190 = vsyncpa [#allocation9], 1

</llo_original>
